<compile_context>
chip_gen: v6e
topology: v6e:2x2x1
jax: 0.10.0
libtpu: 0.0.40
codegen_flags: <defaults>
</compile_context>

<pallas_src>
import functools

import jax
import jax.numpy as jnp
from jax import lax
from jax.experimental import pallas as pl
from jax.experimental.pallas import tpu as pltpu


def _round_up(x, m):
    return (x + m - 1) // m * m


# ---------------------------------------------------------------------------
# Generation-aware VMEM configuration (v5e/v6e: 128 MiB per core, v7x: 64 MiB)
# ---------------------------------------------------------------------------
def _vmem_config():
    """Returns (scoped vmem_limit_bytes, per-core tile budget bytes)."""
    cap = None
    try:
        info = pltpu.get_tpu_info()
        for name in ("vmem_capacity_bytes", "vmem_size_bytes", "vmem_bytes"):
            val = getattr(info, name, None)
            if val:
                cap = int(val)
                break
    except Exception:
        cap = None
    if cap is None:
        try:
            kind = jax.devices()[0].device_kind.lower()
            cap = 64 * 2**20 if "v7" in kind else 128 * 2**20
        except Exception:
            cap = 64 * 2**20                      # conservative: smallest VMEM
    if cap >= 128 * 2**20:                        # v5e / v6e
        return 96 * 2**20, 72 * 2**20
    return 44 * 2**20, 34 * 2**20                 # v7x: 64 MiB physical per TC


_VMEM_LIMIT_BYTES, _TILE_BUDGET_BYTES = _vmem_config()

_COMPILER_PARAMS = pltpu.CompilerParams(
    dimension_semantics=("parallel",),            # batch tiles are independent
    vmem_limit_bytes=_VMEM_LIMIT_BYTES,
)

_TB_CANDIDATES = (2048, 1024, 512, 256, 128)


def _blk_bytes(rows, cols):
    """Bytes one pipeline buffer of an (rows, cols) 32-bit block occupies in
    VMEM, accounting for (8, 128) tile padding."""
    return (-(-rows // 8)) * (-(-cols // 128)) * (8 * 128 * 4)


def _smooth_vmem_bytes(tb, d_pad, g_pad):
    """Per-core VMEM estimate for the smooth kernel (everything is counted
    double-buffered).
    # TODO(synk): marking the grid-invariant table/W/b specs with
    # pipeline_mode=pl.Buffered(1) would halve the resident reservation; left
    # out here to keep the lowering on the well-trodden default pipeline path.
    """
    resident = (_blk_bytes(g_pad, 2 * d_pad)      # fused scale|offset table
                + _blk_bytes(d_pad, 1)            # W column
                + _blk_bytes(1, 1))               # bias
    per_step = (2 * _blk_bytes(tb, d_pad)         # features in + smoothed out
                + 2 * _blk_bytes(tb, 1))          # bin-idx in + pred out (lane-padded)
    return 2 * (resident + per_step)


# ---------------------------------------------------------------------------
# Pallas kernels
# ---------------------------------------------------------------------------
def _fds_smooth_kernel(idx_ref, f_ref, table_ref, w_ref, b_ref,
                       smooth_ref, pred_ref):
    """One batch tile: fused bin-stat gather + folded calibration + Linear(D,1)."""
    f = f_ref[...]                                   # (TB, D_pad) f32
    idx = idx_ref[...]                               # (TB, 1) int32
    tb, d_pad = f.shape
    g_pad = table_ref.shape[0]

    # Exact one-hot gather of each sample's bin row from the fused
    # (scale | offset) table: a single (TB, G_pad) @ (G_pad, 2*D_pad) MXU pass.
    # Everything stays f32: the gather is exact only because the x*1 + 0 terms
    # are exact on the f32 MXU path (do NOT downcast the table / precision).
    one_hot = (lax.broadcasted_iota(jnp.int32, (tb, g_pad), 1)
               == idx).astype(jnp.float32)           # (TB, G_pad)
    gathered = jnp.dot(one_hot, table_ref[...],
                       preferred_element_type=jnp.float32)   # (TB, 2*D_pad)
    scale = gathered[:, :d_pad]
    offset = gathered[:, d_pad:]

    # (f - m1)*sqrt(v2/v1) + m2 was folded host-side into f*scale + offset:
    # no sqrt/div/compare/lane-reduce remains in the hot loop.
    smoothed = f * scale + offset
    smooth_ref[...] = smoothed

    # pred_layer = Linear(D, 1) in plain NN orientation so the (TB, D_pad)
    # tile is never relayouted for a lane-contracting dot; the masked (TB, 1)
    # store is only TB*4 bytes.
    pred_ref[...] = (jnp.dot(smoothed, w_ref[...],
                             preferred_element_type=jnp.float32) + b_ref[...])


def _fds_pred_kernel(f_ref, w_ref, b_ref, pred_ref):
    """pred_layer only (eval path / epoch < start_smooth)."""
    pred_ref[...] = (jnp.dot(f_ref[...], w_ref[...],
                             preferred_element_type=jnp.float32) + b_ref[...])


# ---------------------------------------------------------------------------
# jit-wrapped launchers (pad / slice only when shapes are actually unaligned)
# ---------------------------------------------------------------------------
@functools.partial(jax.jit, static_argnames=("tb",))
def _fds_smooth_forward(features, labels, bin_edges, table, w_col, bias, *, tb):
    B, D = features.shape
    g_pad, two_d_pad = table.shape
    d_pad = two_d_pad // 2
    b_pad = _round_up(B, tb)

    # find_bin: searchsorted(bin_edges, labels, right=True) - 1, clamped.
    lbl = labels.reshape(-1).astype(jnp.float32)
    idx = jnp.sum(bin_edges[None, :] <= lbl[:, None], axis=1) - 1
    idx = jnp.clip(idx, 0, bin_edges.shape[0] - 2).astype(jnp.int32)
    idx_col = idx.reshape(B, 1)

    f_in = features
    if (B, D) != (b_pad, d_pad):
        f_in = jnp.pad(features, ((0, b_pad - B), (0, d_pad - D)))
    if B != b_pad:
        idx_col = jnp.pad(idx_col, ((0, b_pad - B), (0, 0)))

    smoothed_p, pred_p = pl.pallas_call(
        _fds_smooth_kernel,
        out_shape=(jax.ShapeDtypeStruct((b_pad, d_pad), jnp.float32),
                   jax.ShapeDtypeStruct((b_pad, 1), jnp.float32)),
        grid=(b_pad // tb,),
        in_specs=[
            pl.BlockSpec((tb, 1), lambda i: (i, 0)),              # bin idx
            pl.BlockSpec((tb, d_pad), lambda i: (i, 0)),          # features
            pl.BlockSpec((g_pad, 2 * d_pad), lambda i: (0, 0)),   # scale|offset (resident)
            pl.BlockSpec((d_pad, 1), lambda i: (0, 0)),           # W column (resident)
            pl.BlockSpec((1, 1), lambda i: (0, 0)),               # bias (resident)
        ],
        out_specs=(pl.BlockSpec((tb, d_pad), lambda i: (i, 0)),   # smoothed
                   pl.BlockSpec((tb, 1), lambda i: (i, 0))),      # pred
        compiler_params=_COMPILER_PARAMS,
    )(idx_col, f_in, table, w_col, bias)

    # NOTE: padded batch rows go through the calibration math and are only
    # correct because they are sliced off here; keep the slice in sync with
    # any future input_output_aliases use.
    smoothed = smoothed_p if (B, D) == (b_pad, d_pad) else smoothed_p[:B, :D]
    pred = pred_p if B == b_pad else pred_p[:B]
    return smoothed, pred


@functools.partial(jax.jit, static_argnames=("tb",))
def _fds_pred_forward(features, w_col, bias, *, tb):
    B, D = features.shape
    d_pad = w_col.shape[0]
    b_pad = _round_up(B, tb)
    f_in = features
    if (B, D) != (b_pad, d_pad):
        f_in = jnp.pad(features, ((0, b_pad - B), (0, d_pad - D)))
    pred_p = pl.pallas_call(
        _fds_pred_kernel,
        out_shape=jax.ShapeDtypeStruct((b_pad, 1), jnp.float32),
        grid=(b_pad // tb,),
        in_specs=[pl.BlockSpec((tb, d_pad), lambda i: (i, 0)),
                  pl.BlockSpec((d_pad, 1), lambda i: (0, 0)),
                  pl.BlockSpec((1, 1), lambda i: (0, 0))],
        out_specs=pl.BlockSpec((tb, 1), lambda i: (i, 0)),
        compiler_params=_COMPILER_PARAMS,
    )(f_in, w_col, bias)
    return pred_p if B == b_pad else pred_p[:B]


# ---------------------------------------------------------------------------
# Python-side module (parameter / buffer container + glue)
# ---------------------------------------------------------------------------
class FDSLayerPallas:
    def __init__(self, feature_dim, granularity=100, y_min=0.0, y_max=10.0,
                 start_update=0, start_smooth=2, seed=0):
        assert start_update + 1 < start_smooth
        self.feature_dim = feature_dim
        self.granularity = granularity
        self.start_update = start_update
        self.start_smooth = start_smooth

        self.d_pad = _round_up(feature_dim, 128)
        self.g = granularity - 1
        self.g_pad = _round_up(self.g, 128)

        key = jax.random.PRNGKey(seed)
        k_w, k_b, k_m1, k_v1, k_m2, k_v2 = jax.random.split(key, 6)

        # pred_layer = nn.Linear(feature_dim, 1): W stored as [D, 1], b as [1, 1].
        self.W = jax.random.normal(k_w, (feature_dim, 1), jnp.float32) * 0.1
        self.b = jax.random.normal(k_b, (1, 1), jnp.float32) * 0.1

        # FDS buffers (torch: _register_buffers), filled with deterministic
        # non-trivial values so the smoothing path is actually exercised.
        self.running_mean_last_epoch = (
            jax.random.normal(k_m1, (self.g, feature_dim), jnp.float32) * 0.5)
        self.running_var_last_epoch = jax.random.uniform(
            k_v1, (self.g, feature_dim), jnp.float32, minval=0.5, maxval=1.5)
        self.smoothed_mean_last_epoch = (
            jax.random.normal(k_m2, (self.g, feature_dim), jnp.float32) * 0.5)
        self.smoothed_var_last_epoch = jax.random.uniform(
            k_v2, (self.g, feature_dim), jnp.float32, minval=0.5, maxval=1.5)

        # bin_edges buffer (registered on epoch 0 in update_running_stats).
        self.bin_edges = jnp.linspace(y_min, y_max, granularity).astype(jnp.float32)

        self._refresh_padded_params()

    # --- fold the calibration into kernel-facing tables (rebuild after any
    #     buffer update) -------------------------------------------------------
    def _refresh_padded_params(self):
        D, dp, g, gp = self.feature_dim, self.d_pad, self.g, self.g_pad
        m1 = self.running_mean_last_epoch
        v1 = self.running_var_last_epoch
        m2 = self.smoothed_mean_last_epoch
        v2 = self.smoothed_var_last_epoch

        # torch semantics: sum(v1_bin) < 1e-10 -> whole bin untouched;
        # v1[d] == 0 -> that dim untouched.
        keep_bin = jnp.sum(v1, axis=1, keepdims=True) < 1e-10       # (g, 1)
        zero_var = v1 == 0.0
        passthrough = jnp.logical_or(keep_bin, zero_var)
        ratio = v2 / jnp.where(zero_var, 1.0, v1)
        # TODO(synk): clip_min/clip_max are None in this config; if configured,
        # apply jnp.clip(ratio, clip_min, clip_max) here (folded into the table).
        scale = jnp.where(passthrough, 1.0, jnp.sqrt(ratio))
        offset = jnp.where(passthrough, 0.0, m2 - m1 * scale)

        scale_p = jnp.pad(scale, ((0, gp - g), (0, dp - D)))
        offset_p = jnp.pad(offset, ((0, gp - g), (0, dp - D)))
        self._table_pad = jnp.concatenate([scale_p, offset_p], axis=1)  # (gp, 2*dp)
        self._w_col_pad = jnp.pad(self.W, ((0, dp - D), (0, 0)))        # (dp, 1)

    # --- find_bin: torch.searchsorted(bin_edges, labels, right=True) - 1 -------
    def _find_left_bin_edges(self, labels):
        lbl = jnp.asarray(labels, jnp.float32).reshape(-1)
        idx = jnp.sum(self.bin_edges[None, :] <= lbl[:, None], axis=1) - 1
        return jnp.clip(idx, 0, self.bin_edges.shape[0] - 2).astype(jnp.int32)

    # --- tiling choice ---------------------------------------------------------
    def _pick_tile(self, B):
        def fits(tb):
            return _smooth_vmem_bytes(tb, self.d_pad, self.g_pad) <= _TILE_BUDGET_BYTES

        b_aligned = _round_up(max(B, 1), 8)
        if b_aligned <= 1024 and fits(b_aligned):
            return b_aligned                      # one tile covers the whole batch
        for tb in _TB_CANDIDATES:                 # largest fitting tile first
            if tb <= b_aligned and fits(tb):
                return tb
        for tb in (64, 32, 16, 8):                # huge-D fallback
            if fits(tb):
                return tb
        return 8

    # --- forward ---------------------------------------------------------------
    def forward(self, features, labels, epoch, training=True):
        features = jnp.asarray(features, jnp.float32)
        B, D = features.shape
        assert D == self.feature_dim
        tb = self._pick_tile(B)

        if not training:
            return _fds_pred_forward(features, self._w_col_pad, self.b, tb=tb)

        if epoch < self.start_smooth:
            # _smooth is the identity before start_smooth: pred-only kernel.
            return features, _fds_pred_forward(features, self._w_col_pad, self.b, tb=tb)

        labels = jnp.asarray(labels, jnp.float32)
        return _fds_smooth_forward(features, labels, self.bin_edges,
                                   self._table_pad, self._w_col_pad, self.b, tb=tb)


# ---------------------------------------------------------------------------
# Pure-JAX reference (mirrors the torch forward) for a sanity check
# ---------------------------------------------------------------------------
def _reference_forward(layer, features, labels, epoch):
    f = jnp.asarray(features, jnp.float32)
    if epoch < layer.start_smooth:
        return f, f @ layer.W + layer.b
    idx = layer._find_left_bin_edges(labels)
    m1 = layer.running_mean_last_epoch[idx]
    v1 = layer.running_var_last_epoch[idx]
    m2 = layer.smoothed_mean_last_epoch[idx]
    v2 = layer.smoothed_var_last_epoch[idx]
    keep_all = jnp.sum(v1, axis=-1, keepdims=True) < 1e-10
    zero_var = v1 == 0.0
    factor = v2 / jnp.where(zero_var, 1.0, v1)
    calibrated = (f - m1) * jnp.sqrt(factor) + m2
    smoothed = jnp.where(jnp.logical_or(keep_all, zero_var), f, calibrated)
    return smoothed, smoothed @ layer.W + layer.b


if __name__ == "__main__":
    B, D = 10, 32
    layer = FDSLayerPallas(feature_dim=D, granularity=100,
                           y_min=0.0, y_max=10.0,
                           start_update=0, start_smooth=2, seed=0)

    key = jax.random.PRNGKey(0)
    k_f, k_l = jax.random.split(key)
    features = jax.random.normal(k_f, (B, D), jnp.float32)
    labels = jax.random.uniform(k_l, (B,), jnp.float32, minval=0.0, maxval=10.0)

    # 1) training, smoothing active (epoch >= start_smooth)
    smoothed, pred = layer.forward(features, labels, epoch=3, training=True)
    smoothed = jax.block_until_ready(smoothed)
    pred = jax.block_until_ready(pred)
    ref_s, ref_p = _reference_forward(layer, features, labels, 3)
    assert smoothed.shape == (B, D) and pred.shape == (B, 1)
    assert jnp.allclose(smoothed, ref_s, atol=1e-4, rtol=1e-4)
    assert jnp.allclose(pred, ref_p, atol=1e-4, rtol=1e-4)

    # 2) training, epoch < start_smooth -> identity features, pred-only kernel
    feat_id, pred_early = layer.forward(features, labels, epoch=1, training=True)
    pred_early = jax.block_until_ready(pred_early)
    _, ref_p1 = _reference_forward(layer, features, labels, 1)
    assert jnp.allclose(feat_id, features)
    assert jnp.allclose(pred_early, ref_p1, atol=1e-4, rtol=1e-4)

    # 3) eval path
    pred_eval = jax.block_until_ready(
        layer.forward(features, labels, epoch=3, training=False))
    assert pred_eval.shape == (B, 1)
    assert jnp.allclose(pred_eval, features @ layer.W + layer.b,
                        atol=1e-4, rtol=1e-4)

    print("KERNEL_OK")
</pallas_src>

<mosaic_0001>
module attributes {stable_mosaic.version = 11 : i64} {
  func.func @_fds_smooth_kernel(%arg0: i32, %arg1: memref<16x1xi32, #tpu.memory_space<vmem>>, %arg2: memref<16x128xf32, #tpu.memory_space<vmem>>, %arg3: memref<128x256xf32, #tpu.memory_space<vmem>>, %arg4: memref<128x1xf32, #tpu.memory_space<vmem>>, %arg5: memref<1x1xf32, #tpu.memory_space<vmem>>, %arg6: memref<16x128xf32, #tpu.memory_space<vmem>>, %arg7: memref<16x1xf32, #tpu.memory_space<vmem>>) attributes {dimension_semantics = [#tpu.dimension_semantics<parallel>], iteration_bounds = array<i64: 1>, scalar_prefetch = 0 : i64, scratch_operands = 0 : i64, tpu.core_type = #tpu.core_type<tc>, window_params = [{transform_indices = @transform_0, window_bounds = array<i64: 16, 1>}, {transform_indices = @transform_1, window_bounds = array<i64: 16, 128>}, {pipeline_mode = #tpu.pipeline_mode<synchronous>, transform_indices = @transform_2, window_bounds = array<i64: 128, 256>}, {pipeline_mode = #tpu.pipeline_mode<synchronous>, transform_indices = @transform_3, window_bounds = array<i64: 128, 1>}, {pipeline_mode = #tpu.pipeline_mode<synchronous>, transform_indices = @transform_4, window_bounds = array<i64: 1, 1>}, {transform_indices = @transform_5, window_bounds = array<i64: 16, 128>}, {transform_indices = @transform_6, window_bounds = array<i64: 16, 1>}]} {
    %c0 = arith.constant 0 : index
    %c0_0 = arith.constant 0 : index
    %0 = vector.load %arg2[%c0, %c0_0] : memref<16x128xf32, #tpu.memory_space<vmem>>, vector<16x128xf32>
    %c0_1 = arith.constant 0 : index
    %c0_2 = arith.constant 0 : index
    %1 = vector.load %arg1[%c0_1, %c0_2] : memref<16x1xi32, #tpu.memory_space<vmem>>, vector<16x1xi32>
    %2 = tpu.iota {dimensions = array<i32: 1>} : vector<16x128xi32>
    %3 = vector.broadcast %1 : vector<16x1xi32> to vector<16x128xi32>
    %4 = arith.cmpi eq, %2, %3 : vector<16x128xi32>
    %5 = arith.extui %4 : vector<16x128xi1> to vector<16x128xi32>
    %6 = arith.sitofp %5 : vector<16x128xi32> to vector<16x128xf32>
    %c0_3 = arith.constant 0 : index
    %c0_4 = arith.constant 0 : index
    %7 = vector.load %arg3[%c0_3, %c0_4] : memref<128x256xf32, #tpu.memory_space<vmem>>, vector<128x256xf32>
    %cst = arith.constant dense<0.000000e+00> : vector<16x256xf32>
    %8 = tpu.matmul %6, %7, %cst {dimension_numbers = #tpu.dot_dimension_numbers<[1], [0], [0], [1], [0, 0, 1, 1], [], []>} : vector<16x128xf32>, vector<128x256xf32>, vector<16x256xf32> -> vector<16x256xf32>
    %9 = vector.extract_strided_slice %8 {offsets = [0, 0], sizes = [16, 128], strides = [1, 1]} : vector<16x256xf32> to vector<16x128xf32>
    %10 = vector.extract_strided_slice %8 {offsets = [0, 128], sizes = [16, 128], strides = [1, 1]} : vector<16x256xf32> to vector<16x128xf32>
    %11 = arith.mulf %0, %9 : vector<16x128xf32>
    %12 = arith.addf %11, %10 : vector<16x128xf32>
    %c0_5 = arith.constant 0 : index
    %c0_6 = arith.constant 0 : index
    %13 = vector.load %arg6[%c0_5, %c0_6] : memref<16x128xf32, #tpu.memory_space<vmem>>, vector<16x128xf32>
    tpu.vector_store %arg6[%c0_5, %c0_6], %12 {strides = array<i32>} : memref<16x128xf32, #tpu.memory_space<vmem>>, vector<16x128xf32>,
    %c0_7 = arith.constant 0 : index
    %c0_8 = arith.constant 0 : index
    %14 = vector.load %arg4[%c0_7, %c0_8] : memref<128x1xf32, #tpu.memory_space<vmem>>, vector<128x1xf32>
    %cst_9 = arith.constant dense<0.000000e+00> : vector<16x1xf32>
    %15 = tpu.matmul %12, %14, %cst_9 {dimension_numbers = #tpu.dot_dimension_numbers<[1], [0], [0], [1], [0, 0, 1, 1], [], []>} : vector<16x128xf32>, vector<128x1xf32>, vector<16x1xf32> -> vector<16x1xf32>
    %c0_10 = arith.constant 0 : index
    %c0_11 = arith.constant 0 : index
    %16 = vector.load %arg5[%c0_10, %c0_11] : memref<1x1xf32, #tpu.memory_space<vmem>>, vector<1x1xf32>
    %17 = vector.broadcast %16 : vector<1x1xf32> to vector<16x1xf32>
    %18 = arith.addf %15, %17 : vector<16x1xf32>
    %c0_12 = arith.constant 0 : index
    %c0_13 = arith.constant 0 : index
    %19 = vector.load %arg7[%c0_12, %c0_13] : memref<16x1xf32, #tpu.memory_space<vmem>>, vector<16x1xf32>
    tpu.vector_store %arg7[%c0_12, %c0_13], %18 {strides = array<i32>} : memref<16x1xf32, #tpu.memory_space<vmem>>, vector<16x1xf32>,
    return
  }
  func.func @transform_0(%arg0: i32) -> (i32, i32) {
    %c0_i32 = arith.constant 0 : i32
    %c0_i32_0 = arith.constant 0 : i32
    return %arg0, %c0_i32 : i32, i32
  }
  func.func @transform_1(%arg0: i32) -> (i32, i32) {
    %c0_i32 = arith.constant 0 : i32
    %c0_i32_0 = arith.constant 0 : i32
    return %arg0, %c0_i32 : i32, i32
  }
  func.func @transform_2(%arg0: i32) -> (i32, i32) {
    %c0_i32 = arith.constant 0 : i32
    %c0_i32_0 = arith.constant 0 : i32
    %c0_i32_1 = arith.constant 0 : i32
    return %c0_i32, %c0_i32_0 : i32, i32
  }
  func.func @transform_3(%arg0: i32) -> (i32, i32) {
    %c0_i32 = arith.constant 0 : i32
    %c0_i32_0 = arith.constant 0 : i32
    %c0_i32_1 = arith.constant 0 : i32
    return %c0_i32, %c0_i32_0 : i32, i32
  }
  func.func @transform_4(%arg0: i32) -> (i32, i32) {
    %c0_i32 = arith.constant 0 : i32
    %c0_i32_0 = arith.constant 0 : i32
    %c0_i32_1 = arith.constant 0 : i32
    return %c0_i32, %c0_i32_0 : i32, i32
  }
  func.func @transform_5(%arg0: i32) -> (i32, i32) {
    %c0_i32 = arith.constant 0 : i32
    %c0_i32_0 = arith.constant 0 : i32
    return %arg0, %c0_i32 : i32, i32
  }
  func.func @transform_6(%arg0: i32) -> (i32, i32) {
    %c0_i32 = arith.constant 0 : i32
    %c0_i32_0 = arith.constant 0 : i32
    return %arg0, %c0_i32 : i32, i32
  }
}

</mosaic_0001>

<llo_original>
// kernel: _fds_smooth_forward.1
$region0: #{_fds_smooth_forward.1}
  #allocation0 [shape = 'u32[]', space=smem, size = 0x4, offset = 0x4, fixed_abs, tag = 'smem constant byte address 0x4 - core index']
  #allocation1 [shape = 'u32[144,128]{1,0:T(1,128)}', space=vmem, size = 0x12000, scoped, tag = 'internal scratch']
  #allocation2 [shape = 'f32[1,1]{1,0:T(1,128)S(1)}', space=vmem, size = 0x200, scoped, tag = 'scoped memory for _fds_smooth_forward.1']
  %s0 = inlined_call_operand.vmem [shape: s32[16,1], index: 0, kind: input, shape index: {}]
  %s1 = inlined_call_operand.vmem [shape: f32[16,128], index: 1, kind: input, shape index: {}]
  %s2 = inlined_call_operand.hbm [shape: f32[128,256], index: 2, kind: input, shape index: {}]
  %s3 = inlined_call_operand.vmem [shape: f32[128,1], index: 3, kind: input, shape index: {}]
  %s4 = inlined_call_operand.<no memory space> [shape: f32[1,1], index: 4, kind: input, shape index: {}]
  %s5 = inlined_call_operand.hbm [shape: f32[16,128], index: 5, kind: output, shape index: {0}]
  %s6 = inlined_call_operand.vmem [shape: f32[16,1], index: 6, kind: output, shape index: {1}]
  %7 = xla_tuple %s5, %s6
  %s8 = sld [smem:[#allocation0]]
  $region42: #{_fds_smooth_forward.1} parent=0
    _
  %s10 = ssub.s32 1, %s8
  %s11 = scalar_select 0, %s10, %s8
  %v12 = vstv %s4
  %13 = vst [vmem:[#allocation2] sm:$0x1] %v12
  $region1: #{_fds_smooth_forward.1} parent=0
    #allocation3 [shape = 'u8[131072]{0}', space=vmem, size = 0x20000, scoped, tag = 'input window, operand 2, single buffered']
    #allocation4 [shape = 's32[1]{0}', space=sflag, size = 0x4, scoped, tag = 'scoped memory for _fds_smooth_forward.1']
    #allocation5 [shape = 's32[1]{0}', space=sflag, size = 0x4, scoped, tag = 'scoped memory for _fds_smooth_forward.1']
    #allocation6 [shape = 'u8[8192]{0}', space=vmem, size = 0x2000, scoped, tag = 'output window, operand 0, single buffered']
    %14 = vsyncpa [#allocation4], 0
    %15 = vsyncpa [#allocation5], 0
    // Predicated region
    $region2: #{_fds_smooth_forward.1} parent=1 // pred_check
      _
    $region3: #{_fds_smooth_forward.1} parent=1 // pred_check_branch
      %17 = sbr.rel (0) target = $region5
    $region4: #{_fds_smooth_forward.1} parent=1 // pred_region
      _
    $region5: #{_fds_smooth_forward.1} parent=1 // pred_fallthru
      _
    // Predicated region
    $region6: #{_fds_smooth_forward.1} parent=1 // pred_check
      _
    $region7: #{_fds_smooth_forward.1} parent=1 // pred_check_branch
      %19 = sbr.rel (0) target = $region9
    $region8: #{_fds_smooth_forward.1} parent=1 // pred_region
      _
    $region9: #{_fds_smooth_forward.1} parent=1 // pred_fallthru
      _
    // Predicated region
    $region10: #{_fds_smooth_forward.1} parent=1 // pred_check
      _
    $region11: #{_fds_smooth_forward.1} parent=1 // pred_check_branch
      %21 = sbr.rel (0) target = $region13
    $region12: #{_fds_smooth_forward.1} parent=1 // pred_region
      %s23 = ssub.s32 4096, 4096
      %24 = vsyncadd [#allocation4], %s23
      %s25 = sshll.u32 [#allocation3], 4
      %s26 = int_to_ptr.vmem [resolvable:$true] %s25
      %31 = dma.hbm_to_vmem [thread:$0]  %s2, 4096, %s26, [#allocation4], 256, 256, 16
    $region13: #{_fds_smooth_forward.1} parent=1 // pred_fallthru
      _
    // Predicated region
    $region14: #{_fds_smooth_forward.1} parent=1 // pred_check
      _
    $region15: #{_fds_smooth_forward.1} parent=1 // pred_check_branch
      %33 = sbr.rel (0) target = $region17
    $region16: #{_fds_smooth_forward.1} parent=1 // pred_region
      _
    $region17: #{_fds_smooth_forward.1} parent=1 // pred_fallthru
      _
    // Predicated region
    $region18: #{_fds_smooth_forward.1} parent=1 // pred_check
      _
    $region19: #{_fds_smooth_forward.1} parent=1 // pred_check_branch
      %35 = sbr.rel (0) target = $region21
    $region20: #{_fds_smooth_forward.1} parent=1 // pred_region
      _
    $region21: #{_fds_smooth_forward.1} parent=1 // pred_fallthru
      _
    // Predicated region
    $region22: #{_fds_smooth_forward.1} parent=1 // pred_check
      _
    $region23: #{_fds_smooth_forward.1} parent=1 // pred_check_branch
      %37 = sbr.rel (0) target = $region25
    $region24: #{_fds_smooth_forward.1} parent=1 // pred_region
      %38 = dma.done [#allocation4], 4096
    $region25: #{_fds_smooth_forward.1} parent=1 // pred_fallthru
      _
    %v39 = vld [vmem:[%s1] sm:$0xff]
    %v40 = vld [vmem:[%s1 + $0x8] sm:$0xff]
    %v41 = vld [vmem:[%s0] sm:$0xff]
    %v42 = vld [vmem:[%s0 + $0x8] sm:$0xff]
    %v43 = vlaneseq
    %v44 = vand.u32 %v43, 127
    %45 = vset.pattern.permute.xlu0 0
    %46 = vperm.xlu0 %45, %v41
    %v47 = vpop.permute.xlu0 %46
    %48 = vset.pattern.permute.xlu0 0
    %49 = vperm.xlu0 %48, %v42
    %v50 = vpop.permute.xlu0 %49
    %vm51 = vcmp.eq.s32.totalorder %v44, %v47
    %vm52 = vcmp.eq.s32.totalorder %v44, %v50
    %v53 = vsel %vm51, 1, 0
    %v54 = vsel %vm52, 1, 0
    %v55 = vcvt.s32.f32 %v53
    %v56 = vcvt.s32.f32 %v54
    %v57 = vld [vmem:[#allocation3] sm:$0xff]
    %v58 = vld [vmem:[#allocation3 + $0x8] sm:$0xff]
    %v59 = vld [vmem:[#allocation3 + $0x10] sm:$0xff]
    %v60 = vld [vmem:[#allocation3 + $0x18] sm:$0xff]
    %v61 = vld [vmem:[#allocation3 + $0x20] sm:$0xff]
    %v62 = vld [vmem:[#allocation3 + $0x28] sm:$0xff]
    %v63 = vld [vmem:[#allocation3 + $0x30] sm:$0xff]
    %v64 = vld [vmem:[#allocation3 + $0x38] sm:$0xff]
    %v65 = vld [vmem:[#allocation3 + $0x40] sm:$0xff]
    %v66 = vld [vmem:[#allocation3 + $0x48] sm:$0xff]
    %v67 = vld [vmem:[#allocation3 + $0x50] sm:$0xff]
    %v68 = vld [vmem:[#allocation3 + $0x58] sm:$0xff]
    %v69 = vld [vmem:[#allocation3 + $0x60] sm:$0xff]
    %v70 = vld [vmem:[#allocation3 + $0x68] sm:$0xff]
    %v71 = vld [vmem:[#allocation3 + $0x70] sm:$0xff]
    %v72 = vld [vmem:[#allocation3 + $0x78] sm:$0xff]
    %v73 = vld [vmem:[#allocation3 + $0x80] sm:$0xff]
    %v74 = vld [vmem:[#allocation3 + $0x88] sm:$0xff]
    %v75 = vld [vmem:[#allocation3 + $0x90] sm:$0xff]
    %v76 = vld [vmem:[#allocation3 + $0x98] sm:$0xff]
    %v77 = vld [vmem:[#allocation3 + $0xa0] sm:$0xff]
    %v78 = vld [vmem:[#allocation3 + $0xa8] sm:$0xff]
    %v79 = vld [vmem:[#allocation3 + $0xb0] sm:$0xff]
    %v80 = vld [vmem:[#allocation3 + $0xb8] sm:$0xff]
    %v81 = vld [vmem:[#allocation3 + $0xc0] sm:$0xff]
    %v82 = vld [vmem:[#allocation3 + $0xc8] sm:$0xff]
    %v83 = vld [vmem:[#allocation3 + $0xd0] sm:$0xff]
    %v84 = vld [vmem:[#allocation3 + $0xd8] sm:$0xff]
    %v85 = vld [vmem:[#allocation3 + $0xe0] sm:$0xff]
    %v86 = vld [vmem:[#allocation3 + $0xe8] sm:$0xff]
    %v87 = vld [vmem:[#allocation3 + $0xf0] sm:$0xff]
    %v88 = vld [vmem:[#allocation3 + $0xf8] sm:$0xff]
    %89 = vmatprep.subr.mxu0 %v88
    %90 = vmatpush1.msra.mxu0 %v87
    %91 = vmatprep.subr.mxu0 %v86
    %92 = vmatpush1.msra.mxu0 %v85
    %93 = vmatprep.subr.mxu0 %v84
    %94 = vmatpush1.msra.mxu0 %v83
    %95 = vmatprep.subr.mxu0 %v82
    %96 = vmatpush1.msra.mxu0 %v81
    %97 = vmatprep.subr.mxu0 %v80
    %98 = vmatpush1.msra.mxu0 %v79
    %99 = vmatprep.subr.mxu0 %v78
    %100 = vmatpush1.msra.mxu0 %v77
    %101 = vmatprep.subr.mxu0 %v76
    %102 = vmatpush1.msra.mxu0 %v75
    %103 = vmatprep.subr.mxu0 %v74
    %104 = vmatpush1.msra.mxu0 %v73
    %105 = vmatprep.subr.mxu0 %v72
    %106 = vmatpush1.msra.mxu0 %v71
    %107 = vmatprep.subr.mxu0 %v70
    %108 = vmatpush1.msra.mxu0 %v69
    %109 = vmatprep.subr.mxu0 %v68
    %110 = vmatpush1.msra.mxu0 %v67
    %111 = vmatprep.subr.mxu0 %v66
    %112 = vmatpush1.msra.mxu0 %v65
    %113 = vmatprep.subr.mxu0 %v64
    %114 = vmatpush1.msra.mxu0 %v63
    %115 = vmatprep.subr.mxu0 %v62
    %116 = vmatpush1.msra.mxu0 %v61
    %117 = vmatprep.subr.mxu0 %v60
    %118 = vmatpush1.msra.mxu0 %v59
    %119 = vmatprep.subr.mxu0 %v58
    %120 = vmatpush1.msra.mxu0 %v57
    %121 = vmatprep.subr.mxu0 0.0
    %122 = vmatpush2.msra.mxu0 0.0
    %123 = vmatprep.subr.mxu0 0.0
    %124 = vmatpush2.msra.mxu0 0.0
    %125 = vmatprep.subr.mxu0 0.0
    %126 = vmatpush2.msra.mxu0 0.0
    %127 = vmatprep.subr.mxu0 0.0
    %128 = vmatpush2.msra.mxu0 0.0
    %129 = vmatprep.subr.mxu0 0.0
    %130 = vmatpush2.msra.mxu0 0.0
    %131 = vmatprep.subr.mxu0 0.0
    %132 = vmatpush2.msra.mxu0 0.0
    %133 = vmatprep.subr.mxu0 0.0
    %134 = vmatpush2.msra.mxu0 0.0
    %135 = vmatprep.subr.mxu0 0.0
    %136 = vmatpush2.msra.mxu0 0.0
    %137 = vmatprep.subr.mxu0 0.0
    %138 = vmatpush2.msra.mxu0 0.0
    %139 = vmatprep.subr.mxu0 0.0
    %140 = vmatpush2.msra.mxu0 0.0
    %141 = vmatprep.subr.mxu0 0.0
    %142 = vmatpush2.msra.mxu0 0.0
    %143 = vmatprep.subr.mxu0 0.0
    %144 = vmatpush2.msra.mxu0 0.0
    %145 = vmatprep.subr.mxu0 0.0
    %146 = vmatpush2.msra.mxu0 0.0
    %147 = vmatprep.subr.mxu0 0.0
    %148 = vmatpush2.msra.mxu0 0.0
    %149 = vmatprep.subr.mxu0 0.0
    %150 = vmatpush2.msra.mxu0 0.0
    %151 = vmatprep.subr.mxu0 0.0
    %152 = vmatpush2.msra.mxu0 0.0
    %153 = vmatprep.mubr.f32.mxu0 0.0
    %154 = vmatmul.mubr.f32.gmra.mxu0 %v55
    %v155 = vpop.f32.mrf.mxu0
    %v156 = vadd.f32 0.0, %v155
    %v157 = vpop.f32.mrf.mxu0
    %v158 = vadd.f32 0.0, %v157
    %159 = vmatprep.mubr.f32.mxu0 0.0
    %160 = vmatmul.mubr.f32.gmra.mxu0 %v56
    %v161 = vpop.f32.mrf.mxu0
    %v162 = vadd.f32 0.0, %v161
    %v163 = vpop.f32.mrf.mxu0
    %v164 = vadd.f32 0.0, %v163
    %165 = vdwg.mxu0
    %v166 = vmul.f32 %v39, %v156
    %v167 = vmul.f32 %v40, %v162
    %v168 = vadd.f32 %v166, %v158
    %v169 = vadd.f32 %v167, %v164
    %170 = vst [vmem:[#allocation6] sm:$0xff] %v168
    %171 = vst [vmem:[#allocation6 + $0x8] sm:$0xff] %v169
    %v172 = vld [vmem:[%s3] sm:$0xff]
    %v173 = vld [vmem:[%s3 + $0x8] sm:$0xff]
    %v174 = vld [vmem:[%s3 + $0x10] sm:$0xff]
    %v175 = vld [vmem:[%s3 + $0x18] sm:$0xff]
    %v176 = vld [vmem:[%s3 + $0x20] sm:$0xff]
    %v177 = vld [vmem:[%s3 + $0x28] sm:$0xff]
    %v178 = vld [vmem:[%s3 + $0x30] sm:$0xff]
    %v179 = vld [vmem:[%s3 + $0x38] sm:$0xff]
    %v180 = vld [vmem:[%s3 + $0x40] sm:$0xff]
    %v181 = vld [vmem:[%s3 + $0x48] sm:$0xff]
    %v182 = vld [vmem:[%s3 + $0x50] sm:$0xff]
    %v183 = vld [vmem:[%s3 + $0x58] sm:$0xff]
    %v184 = vld [vmem:[%s3 + $0x60] sm:$0xff]
    %v185 = vld [vmem:[%s3 + $0x68] sm:$0xff]
    %v186 = vld [vmem:[%s3 + $0x70] sm:$0xff]
    %v187 = vld [vmem:[%s3 + $0x78] sm:$0xff]
    %v188 = vld [vmem:[#allocation2] sm:$0x1]
    %v190 = vlaneseq
    %v191 = vshrl.u32 %v190, 7
    %v192 = vsub.s32 0, %v191
    %v193 = vrot.slane %v188, %v192
    %195 = vmatprep.subr.mxu0 0.0
    %196 = vmatpush1.msra.mxu0 %v187
    %197 = vmatprep.subr.mxu0 0.0
    %198 = vmatpush1.msra.mxu0 %v186
    %199 = vmatprep.subr.mxu0 0.0
    %200 = vmatpush1.msra.mxu0 %v185
    %201 = vmatprep.subr.mxu0 0.0
    %202 = vmatpush1.msra.mxu0 %v184
    %203 = vmatprep.subr.mxu0 0.0
    %204 = vmatpush1.msra.mxu0 %v183
    %205 = vmatprep.subr.mxu0 0.0
    %206 = vmatpush1.msra.mxu0 %v182
    %207 = vmatprep.subr.mxu0 0.0
    %208 = vmatpush1.msra.mxu0 %v181
    %209 = vmatprep.subr.mxu0 0.0
    %210 = vmatpush1.msra.mxu0 %v180
    %211 = vmatprep.subr.mxu0 0.0
    %212 = vmatpush1.msra.mxu0 %v179
    %213 = vmatprep.subr.mxu0 0.0
    %214 = vmatpush1.msra.mxu0 %v178
    %215 = vmatprep.subr.mxu0 0.0
    %216 = vmatpush1.msra.mxu0 %v177
    %217 = vmatprep.subr.mxu0 0.0
    %218 = vmatpush1.msra.mxu0 %v176
    %219 = vmatprep.subr.mxu0 0.0
    %220 = vmatpush1.msra.mxu0 %v175
    %221 = vmatprep.subr.mxu0 0.0
    %222 = vmatpush1.msra.mxu0 %v174
    %223 = vmatprep.subr.mxu0 0.0
    %224 = vmatpush1.msra.mxu0 %v173
    %225 = vmatprep.subr.mxu0 0.0
    %226 = vmatpush1.msra.mxu0 %v172
    %227 = vmatprep.subr.mxu0 0.0
    %228 = vmatpush2.msra.mxu0 0.0
    %229 = vmatprep.subr.mxu0 0.0
    %230 = vmatpush2.msra.mxu0 0.0
    %231 = vmatprep.subr.mxu0 0.0
    %232 = vmatpush2.msra.mxu0 0.0
    %233 = vmatprep.subr.mxu0 0.0
    %234 = vmatpush2.msra.mxu0 0.0
    %235 = vmatprep.subr.mxu0 0.0
    %236 = vmatpush2.msra.mxu0 0.0
    %237 = vmatprep.subr.mxu0 0.0
    %238 = vmatpush2.msra.mxu0 0.0
    %239 = vmatprep.subr.mxu0 0.0
    %240 = vmatpush2.msra.mxu0 0.0
    %241 = vmatprep.subr.mxu0 0.0
    %242 = vmatpush2.msra.mxu0 0.0
    %243 = vmatprep.subr.mxu0 0.0
    %244 = vmatpush2.msra.mxu0 0.0
    %245 = vmatprep.subr.mxu0 0.0
    %246 = vmatpush2.msra.mxu0 0.0
    %247 = vmatprep.subr.mxu0 0.0
    %248 = vmatpush2.msra.mxu0 0.0
    %249 = vmatprep.subr.mxu0 0.0
    %250 = vmatpush2.msra.mxu0 0.0
    %251 = vmatprep.subr.mxu0 0.0
    %252 = vmatpush2.msra.mxu0 0.0
    %253 = vmatprep.subr.mxu0 0.0
    %254 = vmatpush2.msra.mxu0 0.0
    %255 = vmatprep.subr.mxu0 0.0
    %256 = vmatpush2.msra.mxu0 0.0
    %257 = vmatprep.subr.mxu0 0.0
    %258 = vmatpush2.msra.mxu0 0.0
    %259 = vmatprep.mubr.f32.mxu0 0.0
    %260 = vmatmul.mubr.f32.gmra.mxu0 %v168
    %v261 = vpop.f32.mrf.mxu0
    %v262 = vadd.f32 %v193, %v261
    %v263 = vpop.f32.mrf.mxu0
    %264 = vmatprep.mubr.f32.mxu0 0.0
    %265 = vmatmul.mubr.f32.gmra.mxu0 %v169
    %v266 = vpop.f32.mrf.mxu0
    %v267 = vadd.f32 %v193, %v266
    %v268 = vpop.f32.mrf.mxu0
    %269 = vdwg.mxu0
    %vm270 = vcmask 7168
    %271 = vst.msk [vmem:[%s6] sm:$0xff] %vm270, %v262
    %272 = vst.msk [vmem:[%s6 + $0x8] sm:$0xff] %vm270, %v267
    // Predicated region
    $region26: #{_fds_smooth_forward.1} parent=1 // pred_check
      _
    $region27: #{_fds_smooth_forward.1} parent=1 // pred_check_branch
      %274 = sbr.rel (0) target = $region29
    $region28: #{_fds_smooth_forward.1} parent=1 // pred_region
      %s276 = ssub.s32 256, 256
      %277 = vsyncadd [#allocation5], %s276
      %s278 = sshll.u32 [#allocation6], 4
      %s279 = int_to_ptr.vmem [resolvable:$true] %s278
      %284 = dma.vmem_to_hbm [thread:$0]  %s279, 256, %s5, [#allocation5], 128, 128, 8
    $region29: #{_fds_smooth_forward.1} parent=1 // pred_fallthru
      _
    // Predicated region
    $region30: #{_fds_smooth_forward.1} parent=1 // pred_check
      _
    $region31: #{_fds_smooth_forward.1} parent=1 // pred_check_branch
      %286 = sbr.rel (0) target = $region33
    $region32: #{_fds_smooth_forward.1} parent=1 // pred_region
      _
    $region33: #{_fds_smooth_forward.1} parent=1 // pred_fallthru
      _
    // Predicated region
    $region34: #{_fds_smooth_forward.1} parent=1 // pred_check
      _
    $region35: #{_fds_smooth_forward.1} parent=1 // pred_check_branch
      %288 = sbr.rel (0) target = $region37
    $region36: #{_fds_smooth_forward.1} parent=1 // pred_region
      %289 = dma.done [#allocation5], 256
    $region37: #{_fds_smooth_forward.1} parent=1 // pred_fallthru
      _
    // Predicated region
    $region38: #{_fds_smooth_forward.1} parent=1 // pred_check
      _
    $region39: #{_fds_smooth_forward.1} parent=1 // pred_check_branch
      %291 = sbr.rel (0) target = $region41
    $region40: #{_fds_smooth_forward.1} parent=1 // pred_region
      _
    $region41: #{_fds_smooth_forward.1} parent=1 // pred_fallthru
      _
    %292 = vsyncpa [#allocation4], 1
    %293 = vsyncpa [#allocation5], 1

</llo_original>
